<compile_context>
chip_gen: v7x
topology: tpu7x:2x2x1
jax: 0.10.0
libtpu: 0.0.40
codegen_flags: <defaults>
</compile_context>

<pallas_src>
import functools
import math

import jax
import jax.numpy as jnp
from jax.experimental import pallas as pl
from jax.experimental.pallas import tpu as pltpu


def _skc_kernel(rgb_ref, hsv_ref, cmask_ref, wgap_ref, wse_ref, b_ref, o_ref,
                *, H, W, C):
    HW = H * W
    C2 = 2 * C

    rgb = rgb_ref[...]                                # (B, C, HW) f32
    hsv = hsv_ref[...]                                # (B, C, HW) f32

    # Column masks (w == 0 / w == W-1), precomputed in the wrapper: (2, HW).
    cm = cmask_ref[...]
    m_c0 = cm[0:1, :][None]                           # (1, 1, HW)
    m_cL = cm[1:2, :][None]

    def window_sums(x):
        # 9 "edge trick" components of the zero-padded 3x3 window sums, each (B, C).
        total = jnp.sum(x, axis=-1)
        r0 = jnp.sum(x[:, :, 0:W], axis=-1)                            # row h = 0
        rL = jnp.sum(x[:, :, (H - 1) * W:HW], axis=-1)                 # row h = H-1
        c0 = jnp.sum(x * m_c0, axis=-1)                                # col w = 0
        cL = jnp.sum(x * m_cL, axis=-1)                                # col w = W-1
        p00 = jnp.sum(x[:, :, 0:1], axis=-1)                           # (0, 0)
        p0L = jnp.sum(x[:, :, W - 1:W], axis=-1)                       # (0, W-1)
        pL0 = jnp.sum(x[:, :, (H - 1) * W:(H - 1) * W + 1], axis=-1)   # (H-1, 0)
        pLL = jnp.sum(x[:, :, HW - 1:HW], axis=-1)                     # (H-1, W-1)
        return [total, r0, rL, c0, cL, p00, p0L, pL0, pLL]

    # (B, 9*2C): rgb components (component-major, channel-minor), then hsv.
    s_vec = jnp.concatenate(window_sums(rgb) + window_sums(hsv), axis=1)

    b = b_ref[...]                                    # (8, 2C) packed biases
    # GAP(conv3x3(L)) = one matmul against the pre-combined, 1/HW-scaled weight.
    gap = jnp.dot(s_vec, wgap_ref[...],
                  preferred_element_type=jnp.float32) + b[0:1, :]          # (B, 2C)

    # Squeeze-excite MLP (fc1 column-padded / fc2 row-padded to 2C) + softmax.
    w1 = wse_ref[0:C2, :]
    w2 = wse_ref[C2:2 * C2, :]
    wv = wse_ref[2 * C2:3 * C2, :]
    z = jnp.maximum(jnp.dot(gap, w1, preferred_element_type=jnp.float32)
                    + b[1:2, :], 0.0)
    z = jnp.dot(z, w2, preferred_element_type=jnp.float32) + b[2:3, :]
    v = jnp.dot(z, wv, preferred_element_type=jnp.float32) + b[3:4, :]     # (B, 2C)
    v = v - jnp.max(v, axis=1, keepdims=True)
    e = jnp.exp(v)
    att = e / jnp.sum(e, axis=1, keepdims=True)                            # (B, 2C)

    # Per-channel attention: sublane scale broadcast over lanes, two dense stores.
    s1 = att[:, 0:C][:, :, None]                      # (B, C, 1) -> RGB half
    s2 = att[:, C:C2][:, :, None]                     # (B, C, 1) -> HSV half
    o_ref[:, 0:C, :] = (rgb * s1).astype(o_ref.dtype)
    o_ref[:, C:C2, :] = (hsv * s2).astype(o_ref.dtype)


def skc(rgb, hsv, params):
    """rgb, hsv: (N, C, H, W) float32 (NCHW, as in the PyTorch module)."""
    N, C, H, W = rgb.shape
    C2 = 2 * C
    HW = H * W
    Cr = params["w_fc1"].shape[0]

    # Free, contiguous channel-major views of NCHW.
    rgb2 = rgb.reshape(N, C, HW)
    hsv2 = hsv.reshape(N, C, HW)

    # ---- combined conv3x3+GAP weight in the "window sum" component basis ----
    # Component order: [total, row0, rowL, col0, colL, p00, p0L, pL0, pLL].
    w = params["w_conv"].astype(jnp.float32)                  # (Cout, Cin, 3, 3)
    comps = jnp.stack([
        w.sum((2, 3)),                 # total
        -w[:, :, 2, :].sum(-1),        # row h = 0     (excluded when dy = 2)
        -w[:, :, 0, :].sum(-1),        # row h = H-1   (excluded when dy = 0)
        -w[:, :, :, 2].sum(-1),        # col w = 0     (excluded when dx = 2)
        -w[:, :, :, 0].sum(-1),        # col w = W-1   (excluded when dx = 0)
        w[:, :, 2, 2],                 # corner (0, 0)
        w[:, :, 2, 0],                 # corner (0, W-1)
        w[:, :, 0, 2],                 # corner (H-1, 0)
        w[:, :, 0, 0],                 # corner (H-1, W-1)
    ], axis=0)                                                 # (9, Cout, Cin)
    comps = jnp.transpose(comps, (0, 2, 1))                    # (9, Cin, Cout)
    w_gap = jnp.concatenate(
        [comps[:, :C, :].reshape(9 * C, C2),                   # rgb input channels
         comps[:, C:, :].reshape(9 * C, C2)],                  # hsv input channels
        axis=0) * (1.0 / float(HW))                            # (9*2C, 2C)

    # ---- packed SE weights: [fc1 (cols padded Cr->2C); fc2 (rows padded); v1|v2] ----
    w1p = jnp.zeros((C2, C2), jnp.float32).at[:, :Cr].set(params["w_fc1"].T)
    w2p = jnp.zeros((C2, C2), jnp.float32).at[:Cr, :].set(params["w_fc2"].T)
    wv = jnp.concatenate([params["w_v1"].T, params["w_v2"].T], axis=1)     # (2C, 2C)
    w_se = jnp.concatenate([w1p, w2p, wv], axis=0)                         # (3*2C, 2C)

    # ---- packed biases: rows [b_conv, b_fc1(padded), b_fc2, b_v, 0 ...] ----
    b_all = jnp.zeros((8, C2), jnp.float32)
    b_all = b_all.at[0, :].set(params["b_conv"])
    b_all = b_all.at[1, :Cr].set(params["b_fc1"])
    b_all = b_all.at[2, :].set(params["b_fc2"])
    b_all = b_all.at[3, :].set(jnp.concatenate([params["b_v1"], params["b_v2"]]))

    # ---- column masks for the edge-trick column sums ----
    col = jnp.arange(HW, dtype=jnp.int32) % W
    cmask = jnp.stack([(col == 0), (col == W - 1)], axis=0).astype(jnp.float32)

    # ---- batching: MB-scale blocks, but keep >= 2 grid steps (v7x megacore) ----
    per_sample = 2 * C2 * HW * 4                      # in (rgb+hsv) + out, f32
    b_cap = max(1, (4 * 1024 * 1024) // per_sample)
    if N >= 2:
        b_cap = min(b_cap, N // 2)
    B = max(d for d in range(1, N + 1) if N % d == 0 and d <= b_cap)
    # TODO(synk): add an H-tiled two-pass path when a single sample exceeds the VMEM budget.

    # ---- generation-aware VMEM limit from the real footprint ----
    block_bytes = B * per_sample
    aux_bytes = 4 * (w_gap.size + w_se.size + b_all.size + cmask.size) + (256 << 10)
    need = 2 * block_bytes + 2 * aux_bytes + (4 << 20)
    try:
        vmem_cap = int(pltpu.get_tpu_info().vmem_capacity_bytes)
    except Exception:
        vmem_cap = 64 << 20                           # conservative (v7x) fallback
    vmem_limit = int(min(max(need, 16 << 20), (vmem_cap * 3) // 4))

    out = pl.pallas_call(
        functools.partial(_skc_kernel, H=H, W=W, C=C),
        out_shape=jax.ShapeDtypeStruct((N, C2, HW), jnp.float32),
        grid=(N // B,),
        in_specs=[
            pl.BlockSpec((B, C, HW), lambda n: (n, 0, 0)),
            pl.BlockSpec((B, C, HW), lambda n: (n, 0, 0)),
            pl.BlockSpec(cmask.shape, lambda n: (0, 0)),
            pl.BlockSpec(w_gap.shape, lambda n: (0, 0)),
            pl.BlockSpec(w_se.shape, lambda n: (0, 0)),
            pl.BlockSpec(b_all.shape, lambda n: (0, 0)),
        ],
        out_specs=pl.BlockSpec((B, C2, HW), lambda n: (n, 0, 0)),
        compiler_params=pltpu.CompilerParams(
            dimension_semantics=("parallel",),
            vmem_limit_bytes=vmem_limit),
    )(rgb2, hsv2, cmask, w_gap, w_se, b_all)

    return out.reshape(N, C2, H, W)                   # free, contiguous reshape


# ---------------------------------------------------------------------------
# Pure-JAX reference (correctness check only)
# ---------------------------------------------------------------------------
def skc_ref(rgb, hsv, p):
    C = rgb.shape[1]
    L = jnp.concatenate([rgb, hsv], axis=1)                        # (N, 2C, H, W)
    conv = jax.lax.conv_general_dilated(
        L, p["w_conv"], window_strides=(1, 1), padding=((1, 1), (1, 1)),
        dimension_numbers=("NCHW", "OIHW", "NCHW"))
    conv = conv + p["b_conv"].reshape(1, -1, 1, 1)
    s = jnp.mean(conv, axis=(2, 3))                                # (N, 2C)
    z = jnp.maximum(s @ p["w_fc1"].T + p["b_fc1"], 0.0)            # (N, Cr)
    z = z @ p["w_fc2"].T + p["b_fc2"]                              # (N, 2C)
    v1 = z @ p["w_v1"].T + p["b_v1"]                               # (N, C)
    v2 = z @ p["w_v2"].T + p["b_v2"]                               # (N, C)
    att = jax.nn.softmax(jnp.concatenate([v1, v2], axis=1), axis=1)
    s1 = att[:, :C, None, None]
    s2 = att[:, C:, None, None]
    return jnp.concatenate([s1 * rgb, s2 * hsv], axis=1)


def init_params(key, in_ch, reduction_ratio=8):
    C2 = 2 * in_ch
    Cr = max(1, C2 // reduction_ratio)
    ks = jax.random.split(key, 10)

    def u(k, shape, fan_in):
        s = 1.0 / math.sqrt(fan_in)
        return jax.random.uniform(k, shape, jnp.float32, -s, s)

    return {
        "w_conv": u(ks[0], (C2, C2, 3, 3), C2 * 9),
        "b_conv": u(ks[1], (C2,), C2 * 9),
        "w_fc1": u(ks[2], (Cr, C2), C2),
        "b_fc1": u(ks[3], (Cr,), C2),
        "w_fc2": u(ks[4], (C2, Cr), Cr),
        "b_fc2": u(ks[5], (C2,), Cr),
        "w_v1": u(ks[6], (in_ch, C2), C2),
        "b_v1": u(ks[7], (in_ch,), C2),
        "w_v2": u(ks[8], (in_ch, C2), C2),
        "b_v2": u(ks[9], (in_ch,), C2),
    }


if __name__ == "__main__":
    key = jax.random.PRNGKey(0)
    k1, k2, kp = jax.random.split(key, 3)

    N, C, H, W = 2, 8, 16, 16          # in_channels=8 -> 2C=16, reduced=2
    rgb = jax.random.normal(k1, (N, C, H, W), jnp.float32)
    hsv = jax.random.normal(k2, (N, C, H, W), jnp.float32)
    params = init_params(kp, C, reduction_ratio=8)

    skc_jit = jax.jit(skc)
    out = jax.block_until_ready(skc_jit(rgb, hsv, params))
    ref = jax.block_until_ready(skc_ref(rgb, hsv, params))

    assert out.shape == (N, 2 * C, H, W)
    max_err = float(jnp.max(jnp.abs(out - ref)))
    assert jnp.allclose(out, ref, atol=1e-3, rtol=1e-3), max_err

    print("KERNEL_OK")
</pallas_src>

<mosaic_0001>
module attributes {stable_mosaic.version = 11 : i64} {
  func.func @_skc_kernel(%arg0: i32, %arg1: memref<1x8x256xf32, #tpu.memory_space<vmem>>, %arg2: memref<1x8x256xf32, #tpu.memory_space<vmem>>, %arg3: memref<2x256xf32, #tpu.memory_space<vmem>>, %arg4: memref<144x16xf32, #tpu.memory_space<vmem>>, %arg5: memref<48x16xf32, #tpu.memory_space<vmem>>, %arg6: memref<8x16xf32, #tpu.memory_space<vmem>>, %arg7: memref<1x16x256xf32, #tpu.memory_space<vmem>>) attributes {dimension_semantics = [#tpu.dimension_semantics<parallel>], iteration_bounds = array<i64: 2>, scalar_prefetch = 0 : i64, scratch_operands = 0 : i64, tpu.core_type = #tpu.core_type<tc>, window_params = [{transform_indices = @transform_0, window_bounds = array<i64: 1, 8, 256>}, {transform_indices = @transform_1, window_bounds = array<i64: 1, 8, 256>}, {pipeline_mode = #tpu.pipeline_mode<synchronous>, transform_indices = @transform_2, window_bounds = array<i64: 2, 256>}, {pipeline_mode = #tpu.pipeline_mode<synchronous>, transform_indices = @transform_3, window_bounds = array<i64: 144, 16>}, {pipeline_mode = #tpu.pipeline_mode<synchronous>, transform_indices = @transform_4, window_bounds = array<i64: 48, 16>}, {pipeline_mode = #tpu.pipeline_mode<synchronous>, transform_indices = @transform_5, window_bounds = array<i64: 8, 16>}, {transform_indices = @transform_6, window_bounds = array<i64: 1, 16, 256>}]} {
    %c0 = arith.constant 0 : index
    %c0_0 = arith.constant 0 : index
    %c0_1 = arith.constant 0 : index
    %0 = vector.load %arg1[%c0, %c0_0, %c0_1] : memref<1x8x256xf32, #tpu.memory_space<vmem>>, vector<1x8x256xf32>
    %c0_2 = arith.constant 0 : index
    %c0_3 = arith.constant 0 : index
    %c0_4 = arith.constant 0 : index
    %1 = vector.load %arg2[%c0_2, %c0_3, %c0_4] : memref<1x8x256xf32, #tpu.memory_space<vmem>>, vector<1x8x256xf32>
    %c0_5 = arith.constant 0 : index
    %c0_6 = arith.constant 0 : index
    %2 = vector.load %arg3[%c0_5, %c0_6] : memref<2x256xf32, #tpu.memory_space<vmem>>, vector<2x256xf32>
    %3 = vector.extract_strided_slice %2 {offsets = [0, 0], sizes = [1, 256], strides = [1, 1]} : vector<2x256xf32> to vector<1x256xf32>
    %4 = vector.shape_cast %3 : vector<1x256xf32> to vector<1x1x256xf32>
    %5 = vector.extract_strided_slice %2 {offsets = [1, 0], sizes = [1, 256], strides = [1, 1]} : vector<2x256xf32> to vector<1x256xf32>
    %6 = vector.shape_cast %5 : vector<1x256xf32> to vector<1x1x256xf32>
    %cst = arith.constant dense<0.000000e+00> : vector<1x8xf32>
    %7 = vector.multi_reduction <add>, %0, %cst [2] : vector<1x8x256xf32> to vector<1x8xf32>
    %8 = vector.extract_strided_slice %0 {offsets = [0, 0, 0], sizes = [1, 8, 16], strides = [1, 1, 1]} : vector<1x8x256xf32> to vector<1x8x16xf32>
    %cst_7 = arith.constant dense<0.000000e+00> : vector<1x8xf32>
    %9 = vector.multi_reduction <add>, %8, %cst_7 [2] : vector<1x8x16xf32> to vector<1x8xf32>
    %10 = vector.extract_strided_slice %0 {offsets = [0, 0, 240], sizes = [1, 8, 16], strides = [1, 1, 1]} : vector<1x8x256xf32> to vector<1x8x16xf32>
    %cst_8 = arith.constant dense<0.000000e+00> : vector<1x8xf32>
    %11 = vector.multi_reduction <add>, %10, %cst_8 [2] : vector<1x8x16xf32> to vector<1x8xf32>
    %12 = vector.broadcast %4 : vector<1x1x256xf32> to vector<1x8x256xf32>
    %13 = arith.mulf %0, %12 : vector<1x8x256xf32>
    %cst_9 = arith.constant dense<0.000000e+00> : vector<1x8xf32>
    %14 = vector.multi_reduction <add>, %13, %cst_9 [2] : vector<1x8x256xf32> to vector<1x8xf32>
    %15 = vector.broadcast %6 : vector<1x1x256xf32> to vector<1x8x256xf32>
    %16 = arith.mulf %0, %15 : vector<1x8x256xf32>
    %cst_10 = arith.constant dense<0.000000e+00> : vector<1x8xf32>
    %17 = vector.multi_reduction <add>, %16, %cst_10 [2] : vector<1x8x256xf32> to vector<1x8xf32>
    %18 = vector.extract_strided_slice %0 {offsets = [0, 0, 0], sizes = [1, 8, 1], strides = [1, 1, 1]} : vector<1x8x256xf32> to vector<1x8x1xf32>
    %cst_11 = arith.constant dense<0.000000e+00> : vector<1x8xf32>
    %19 = vector.multi_reduction <add>, %18, %cst_11 [2] : vector<1x8x1xf32> to vector<1x8xf32>
    %20 = vector.extract_strided_slice %0 {offsets = [0, 0, 15], sizes = [1, 8, 1], strides = [1, 1, 1]} : vector<1x8x256xf32> to vector<1x8x1xf32>
    %cst_12 = arith.constant dense<0.000000e+00> : vector<1x8xf32>
    %21 = vector.multi_reduction <add>, %20, %cst_12 [2] : vector<1x8x1xf32> to vector<1x8xf32>
    %22 = vector.extract_strided_slice %0 {offsets = [0, 0, 240], sizes = [1, 8, 1], strides = [1, 1, 1]} : vector<1x8x256xf32> to vector<1x8x1xf32>
    %cst_13 = arith.constant dense<0.000000e+00> : vector<1x8xf32>
    %23 = vector.multi_reduction <add>, %22, %cst_13 [2] : vector<1x8x1xf32> to vector<1x8xf32>
    %24 = vector.extract_strided_slice %0 {offsets = [0, 0, 255], sizes = [1, 8, 1], strides = [1, 1, 1]} : vector<1x8x256xf32> to vector<1x8x1xf32>
    %cst_14 = arith.constant dense<0.000000e+00> : vector<1x8xf32>
    %25 = vector.multi_reduction <add>, %24, %cst_14 [2] : vector<1x8x1xf32> to vector<1x8xf32>
    %cst_15 = arith.constant dense<0.000000e+00> : vector<1x8xf32>
    %26 = vector.multi_reduction <add>, %1, %cst_15 [2] : vector<1x8x256xf32> to vector<1x8xf32>
    %27 = vector.extract_strided_slice %1 {offsets = [0, 0, 0], sizes = [1, 8, 16], strides = [1, 1, 1]} : vector<1x8x256xf32> to vector<1x8x16xf32>
    %cst_16 = arith.constant dense<0.000000e+00> : vector<1x8xf32>
    %28 = vector.multi_reduction <add>, %27, %cst_16 [2] : vector<1x8x16xf32> to vector<1x8xf32>
    %29 = vector.extract_strided_slice %1 {offsets = [0, 0, 240], sizes = [1, 8, 16], strides = [1, 1, 1]} : vector<1x8x256xf32> to vector<1x8x16xf32>
    %cst_17 = arith.constant dense<0.000000e+00> : vector<1x8xf32>
    %30 = vector.multi_reduction <add>, %29, %cst_17 [2] : vector<1x8x16xf32> to vector<1x8xf32>
    %31 = vector.broadcast %4 : vector<1x1x256xf32> to vector<1x8x256xf32>
    %32 = arith.mulf %1, %31 : vector<1x8x256xf32>
    %cst_18 = arith.constant dense<0.000000e+00> : vector<1x8xf32>
    %33 = vector.multi_reduction <add>, %32, %cst_18 [2] : vector<1x8x256xf32> to vector<1x8xf32>
    %34 = vector.broadcast %6 : vector<1x1x256xf32> to vector<1x8x256xf32>
    %35 = arith.mulf %1, %34 : vector<1x8x256xf32>
    %cst_19 = arith.constant dense<0.000000e+00> : vector<1x8xf32>
    %36 = vector.multi_reduction <add>, %35, %cst_19 [2] : vector<1x8x256xf32> to vector<1x8xf32>
    %37 = vector.extract_strided_slice %1 {offsets = [0, 0, 0], sizes = [1, 8, 1], strides = [1, 1, 1]} : vector<1x8x256xf32> to vector<1x8x1xf32>
    %cst_20 = arith.constant dense<0.000000e+00> : vector<1x8xf32>
    %38 = vector.multi_reduction <add>, %37, %cst_20 [2] : vector<1x8x1xf32> to vector<1x8xf32>
    %39 = vector.extract_strided_slice %1 {offsets = [0, 0, 15], sizes = [1, 8, 1], strides = [1, 1, 1]} : vector<1x8x256xf32> to vector<1x8x1xf32>
    %cst_21 = arith.constant dense<0.000000e+00> : vector<1x8xf32>
    %40 = vector.multi_reduction <add>, %39, %cst_21 [2] : vector<1x8x1xf32> to vector<1x8xf32>
    %41 = vector.extract_strided_slice %1 {offsets = [0, 0, 240], sizes = [1, 8, 1], strides = [1, 1, 1]} : vector<1x8x256xf32> to vector<1x8x1xf32>
    %cst_22 = arith.constant dense<0.000000e+00> : vector<1x8xf32>
    %42 = vector.multi_reduction <add>, %41, %cst_22 [2] : vector<1x8x1xf32> to vector<1x8xf32>
    %43 = vector.extract_strided_slice %1 {offsets = [0, 0, 255], sizes = [1, 8, 1], strides = [1, 1, 1]} : vector<1x8x256xf32> to vector<1x8x1xf32>
    %cst_23 = arith.constant dense<0.000000e+00> : vector<1x8xf32>
    %44 = vector.multi_reduction <add>, %43, %cst_23 [2] : vector<1x8x1xf32> to vector<1x8xf32>
    %45 = tpu.concatenate %7, %9, %11, %14, %17, %19, %21, %23, %25, %26, %28, %30, %33, %36, %38, %40 in 1 : vector<1x8xf32>, vector<1x8xf32>, vector<1x8xf32>, vector<1x8xf32>, vector<1x8xf32>, vector<1x8xf32>, vector<1x8xf32>, vector<1x8xf32>, vector<1x8xf32>, vector<1x8xf32>, vector<1x8xf32>, vector<1x8xf32>, vector<1x8xf32>, vector<1x8xf32>, vector<1x8xf32>, vector<1x8xf32> -> vector<1x128xf32>
    %46 = tpu.concatenate %42, %44 in 1 : vector<1x8xf32>, vector<1x8xf32> -> vector<1x16xf32>
    %47 = tpu.concatenate %45, %46 in 1 : vector<1x128xf32>, vector<1x16xf32> -> vector<1x144xf32>
    %c0_24 = arith.constant 0 : index
    %c0_25 = arith.constant 0 : index
    %48 = vector.load %arg6[%c0_24, %c0_25] : memref<8x16xf32, #tpu.memory_space<vmem>>, vector<8x16xf32>
    %c0_26 = arith.constant 0 : index
    %c0_27 = arith.constant 0 : index
    %49 = vector.load %arg4[%c0_26, %c0_27] : memref<144x16xf32, #tpu.memory_space<vmem>>, vector<144x16xf32>
    %cst_28 = arith.constant dense<0.000000e+00> : vector<1x16xf32>
    %50 = tpu.matmul %47, %49, %cst_28 {dimension_numbers = #tpu.dot_dimension_numbers<[1], [0], [0], [1], [0, 0, 1, 1], [], []>} : vector<1x144xf32>, vector<144x16xf32>, vector<1x16xf32> -> vector<1x16xf32>
    %51 = vector.extract_strided_slice %48 {offsets = [0, 0], sizes = [1, 16], strides = [1, 1]} : vector<8x16xf32> to vector<1x16xf32>
    %52 = arith.addf %50, %51 : vector<1x16xf32>
    %c0_29 = arith.constant 0 : index
    %c0_30 = arith.constant 0 : index
    %53 = vector.load %arg5[%c0_29, %c0_30] : memref<48x16xf32, #tpu.memory_space<vmem>>, vector<16x16xf32>
    %c16 = arith.constant 16 : index
    %c0_31 = arith.constant 0 : index
    %54 = vector.load %arg5[%c16, %c0_31] : memref<48x16xf32, #tpu.memory_space<vmem>>, vector<16x16xf32>
    %c32 = arith.constant 32 : index
    %c0_32 = arith.constant 0 : index
    %55 = vector.load %arg5[%c32, %c0_32] : memref<48x16xf32, #tpu.memory_space<vmem>>, vector<16x16xf32>
    %cst_33 = arith.constant dense<0.000000e+00> : vector<1x16xf32>
    %56 = tpu.matmul %52, %53, %cst_33 {dimension_numbers = #tpu.dot_dimension_numbers<[1], [0], [0], [1], [0, 0, 1, 1], [], []>} : vector<1x16xf32>, vector<16x16xf32>, vector<1x16xf32> -> vector<1x16xf32>
    %57 = vector.extract_strided_slice %48 {offsets = [1, 0], sizes = [1, 16], strides = [1, 1]} : vector<8x16xf32> to vector<1x16xf32>
    %58 = arith.addf %56, %57 : vector<1x16xf32>
    %cst_34 = arith.constant 0.000000e+00 : f32
    %59 = vector.broadcast %cst_34 : f32 to vector<1x16xf32>
    %60 = arith.maximumf %58, %59 : vector<1x16xf32>
    %cst_35 = arith.constant dense<0.000000e+00> : vector<1x16xf32>
    %61 = tpu.matmul %60, %54, %cst_35 {dimension_numbers = #tpu.dot_dimension_numbers<[1], [0], [0], [1], [0, 0, 1, 1], [], []>} : vector<1x16xf32>, vector<16x16xf32>, vector<1x16xf32> -> vector<1x16xf32>
    %62 = vector.extract_strided_slice %48 {offsets = [2, 0], sizes = [1, 16], strides = [1, 1]} : vector<8x16xf32> to vector<1x16xf32>
    %63 = arith.addf %61, %62 : vector<1x16xf32>
    %cst_36 = arith.constant dense<0.000000e+00> : vector<1x16xf32>
    %64 = tpu.matmul %63, %55, %cst_36 {dimension_numbers = #tpu.dot_dimension_numbers<[1], [0], [0], [1], [0, 0, 1, 1], [], []>} : vector<1x16xf32>, vector<16x16xf32>, vector<1x16xf32> -> vector<1x16xf32>
    %65 = vector.extract_strided_slice %48 {offsets = [3, 0], sizes = [1, 16], strides = [1, 1]} : vector<8x16xf32> to vector<1x16xf32>
    %66 = arith.addf %64, %65 : vector<1x16xf32>
    %cst_37 = arith.constant dense<0xFF800000> : vector<1xf32>
    %67 = vector.multi_reduction <maximumf>, %66, %cst_37 [1] : vector<1x16xf32> to vector<1xf32>
    %68 = vector.shape_cast %67 : vector<1xf32> to vector<1x1xf32>
    %69 = vector.broadcast %68 : vector<1x1xf32> to vector<1x16xf32>
    %70 = arith.subf %66, %69 : vector<1x16xf32>
    %71 = math.exp %70 : vector<1x16xf32>
    %cst_38 = arith.constant dense<0.000000e+00> : vector<1xf32>
    %72 = vector.multi_reduction <add>, %71, %cst_38 [1] : vector<1x16xf32> to vector<1xf32>
    %73 = vector.shape_cast %72 : vector<1xf32> to vector<1x1xf32>
    %74 = vector.broadcast %73 : vector<1x1xf32> to vector<1x16xf32>
    %75 = arith.divf %71, %74 : vector<1x16xf32>
    %76 = vector.extract_strided_slice %75 {offsets = [0, 0], sizes = [1, 8], strides = [1, 1]} : vector<1x16xf32> to vector<1x8xf32>
    %77 = vector.shape_cast %76 : vector<1x8xf32> to vector<1x8x1xf32>
    %78 = vector.extract_strided_slice %75 {offsets = [0, 8], sizes = [1, 8], strides = [1, 1]} : vector<1x16xf32> to vector<1x8xf32>
    %79 = vector.shape_cast %78 : vector<1x8xf32> to vector<1x8x1xf32>
    %80 = vector.broadcast %77 : vector<1x8x1xf32> to vector<1x8x256xf32>
    %81 = arith.mulf %0, %80 : vector<1x8x256xf32>
    %c0_39 = arith.constant 0 : index
    %c0_40 = arith.constant 0 : index
    %c0_41 = arith.constant 0 : index
    %82 = vector.load %arg7[%c0_39, %c0_40, %c0_41] : memref<1x16x256xf32, #tpu.memory_space<vmem>>, vector<1x8x256xf32>
    tpu.vector_store %arg7[%c0_39, %c0_40, %c0_41], %81 {strides = array<i32>} : memref<1x16x256xf32, #tpu.memory_space<vmem>>, vector<1x8x256xf32>,
    %83 = vector.broadcast %79 : vector<1x8x1xf32> to vector<1x8x256xf32>
    %84 = arith.mulf %1, %83 : vector<1x8x256xf32>
    %c0_42 = arith.constant 0 : index
    %c8 = arith.constant 8 : index
    %c0_43 = arith.constant 0 : index
    %85 = vector.load %arg7[%c0_42, %c8, %c0_43] : memref<1x16x256xf32, #tpu.memory_space<vmem>>, vector<1x8x256xf32>
    tpu.vector_store %arg7[%c0_42, %c8, %c0_43], %84 {strides = array<i32>} : memref<1x16x256xf32, #tpu.memory_space<vmem>>, vector<1x8x256xf32>,
    return
  }
  func.func @transform_0(%arg0: i32) -> (i32, i32, i32) {
    %c0_i32 = arith.constant 0 : i32
    %c0_i32_0 = arith.constant 0 : i32
    %c0_i32_1 = arith.constant 0 : i32
    return %arg0, %c0_i32, %c0_i32_0 : i32, i32, i32
  }
  func.func @transform_1(%arg0: i32) -> (i32, i32, i32) {
    %c0_i32 = arith.constant 0 : i32
    %c0_i32_0 = arith.constant 0 : i32
    %c0_i32_1 = arith.constant 0 : i32
    return %arg0, %c0_i32, %c0_i32_0 : i32, i32, i32
  }
  func.func @transform_2(%arg0: i32) -> (i32, i32) {
    %c0_i32 = arith.constant 0 : i32
    %c0_i32_0 = arith.constant 0 : i32
    %c0_i32_1 = arith.constant 0 : i32
    return %c0_i32, %c0_i32_0 : i32, i32
  }
  func.func @transform_3(%arg0: i32) -> (i32, i32) {
    %c0_i32 = arith.constant 0 : i32
    %c0_i32_0 = arith.constant 0 : i32
    %c0_i32_1 = arith.constant 0 : i32
    return %c0_i32, %c0_i32_0 : i32, i32
  }
  func.func @transform_4(%arg0: i32) -> (i32, i32) {
    %c0_i32 = arith.constant 0 : i32
    %c0_i32_0 = arith.constant 0 : i32
    %c0_i32_1 = arith.constant 0 : i32
    return %c0_i32, %c0_i32_0 : i32, i32
  }
  func.func @transform_5(%arg0: i32) -> (i32, i32) {
    %c0_i32 = arith.constant 0 : i32
    %c0_i32_0 = arith.constant 0 : i32
    %c0_i32_1 = arith.constant 0 : i32
    return %c0_i32, %c0_i32_0 : i32, i32
  }
  func.func @transform_6(%arg0: i32) -> (i32, i32, i32) {
    %c0_i32 = arith.constant 0 : i32
    %c0_i32_0 = arith.constant 0 : i32
    %c0_i32_1 = arith.constant 0 : i32
    return %arg0, %c0_i32, %c0_i32_0 : i32, i32, i32
  }
}

</mosaic_0001>

<llo_original>
// kernel: skc.1
$region0: #{skc.1}
  #allocation0 [shape = 'u32[]', space=smem, size = 0x4, offset = 0x4, fixed_abs, tag = 'smem constant byte address 0x4 - core index']
  #allocation1 [shape = 'u32[144,128]{1,0:T(1,128)}', space=vmem, size = 0x12000, scoped, tag = 'internal scratch']
  %s0 = inlined_call_operand.vmem [shape: f32[2,8,256], index: 0, kind: input, shape index: {}]
  %s1 = inlined_call_operand.vmem [shape: f32[2,8,256], index: 1, kind: input, shape index: {}]
  %s2 = inlined_call_operand.vmem [shape: f32[2,256], index: 2, kind: input, shape index: {}]
  %s3 = inlined_call_operand.vmem [shape: f32[144,16], index: 3, kind: input, shape index: {}]
  %s4 = inlined_call_operand.vmem [shape: f32[48,16], index: 4, kind: input, shape index: {}]
  %s5 = inlined_call_operand.vmem [shape: f32[8,16], index: 5, kind: input, shape index: {}]
  %s6 = inlined_call_operand.vmem [shape: f32[2,16,256], index: 6, kind: output, shape index: {}]
  %s7 = sld [smem:[#allocation0]]
  $region57: #{skc.1} parent=0
    _
  %s9 = ssub.s32 1, %s7
  %s10 = scalar_select 0, %s9, %s7
  loop: start=0, step=1, limit=4
  $region2: #{skc.1} parent=0 // loop_pre_header
    _
  $region3: #{skc.1} parent=0 // loop_header
    %s12 = sphi 0, %s16
    %p13 = scmp.ge.s32.totalorder %s12, 4
    %s22 = sphi 0, %s24
    %s25 = sphi 0, %s22
    %s26 = sphi 0, %s25
    %s42 = sphi 0, %s26
    %s48 = sphi 0, %s50
    %s51 = sphi 0, %s48
    %s52 = sphi 0, %s51
    %s68 = sphi 0, %s52
    %s72 = sphi 0, %s72
    %s74 = sphi 0, %s72
    %s75 = sphi 0, %s74
    %s89 = sphi 0, %s75
    %s93 = sphi 0, %s93
    %s95 = sphi 0, %s93
    %s96 = sphi 0, %s95
    %s110 = sphi 0, %s96
    %s114 = sphi 0, %s114
    %s116 = sphi 0, %s114
    %s117 = sphi 0, %s116
    %s131 = sphi 0, %s117
    %s135 = sphi 0, %s135
    %s137 = sphi 0, %s135
    %s138 = sphi 0, %s137
    %s152 = sphi 0, %s138
    %s158 = sphi 0, %s160
    %s161 = sphi 0, %s158
    %s162 = sphi 0, %s161
    %s178 = sphi 0, %s162
  $region4: #{skc.1} parent=0 // loop_header_branch
    %15 = sbr.rel (%p13) target = $region8
  $region5: #{skc.1} parent=0 // loop_body
    %s17 = ssub.s32 %s12, 1
    %s18 = ssub.s32 %s12, 2
    %s19 = sadd.s32 %s12, 1
    %s20 = ssub.s32 %s12, %s19
    %p21 = scmp.eq.s32.totalorder %s20, 0
    %s23 = sadd.s32 %s22, 1
    %s24 = scalar_select %p21, %s22, %s23
    %p27 = pneg %p21
    %p28 = scmp.eq.s32.totalorder %s12, 1
    %p29 = por %p27, %p28
    %p30 = scmp.ne.s32.totalorder %s22, %s25
    %p31 = scmp.eq.s32.totalorder %s12, 0
    %p32 = por %p30, %p31
    %p33 = scmp.ne.s32.totalorder %s22, %s25
    %p34 = scmp.eq.s32.totalorder %s17, 1
    %p35 = por %p33, %p34
    %p36 = scmp.ne.s32.totalorder %s25, %s26
    %p37 = scmp.eq.s32.totalorder %s17, 0
    %p38 = por %p36, %p37
    %p39 = scmp.ne.s32.totalorder %s25, %s26
    %p40 = scmp.eq.s32.totalorder %s18, 1
    %p41 = por %p39, %p40
    %p43 = scmp.ne.s32.totalorder %s26, %s42
    %p44 = scmp.eq.s32.totalorder %s18, 0
    %p45 = por %p43, %p44
    %s46 = ssub.s32 %s12, %s19
    %p47 = scmp.eq.s32.totalorder %s46, 0
    %s49 = sadd.s32 %s48, 1
    %s50 = scalar_select %p47, %s48, %s49
    %p53 = pneg %p47
    %p54 = scmp.eq.s32.totalorder %s12, 1
    %p55 = por %p53, %p54
    %p56 = scmp.ne.s32.totalorder %s48, %s51
    %p57 = scmp.eq.s32.totalorder %s12, 0
    %p58 = por %p56, %p57
    %p59 = scmp.ne.s32.totalorder %s48, %s51
    %p60 = scmp.eq.s32.totalorder %s17, 1
    %p61 = por %p59, %p60
    %p62 = scmp.ne.s32.totalorder %s51, %s52
    %p63 = scmp.eq.s32.totalorder %s17, 0
    %p64 = por %p62, %p63
    %p65 = scmp.ne.s32.totalorder %s51, %s52
    %p66 = scmp.eq.s32.totalorder %s18, 1
    %p67 = por %p65, %p66
    %p69 = scmp.ne.s32.totalorder %s52, %s68
    %p70 = scmp.eq.s32.totalorder %s18, 0
    %p71 = por %p69, %p70
    %s73 = sadd.s32 %s72, 1
    %p76 = scmp.eq.s32.totalorder %s12, 1
    %p77 = scmp.ne.s32.totalorder %s72, %s74
    %p78 = scmp.eq.s32.totalorder %s12, 0
    %p79 = por %p77, %p78
    %p80 = scmp.ne.s32.totalorder %s72, %s74
    %p81 = scmp.eq.s32.totalorder %s17, 1
    %p82 = por %p80, %p81
    %p83 = scmp.ne.s32.totalorder %s74, %s75
    %p84 = scmp.eq.s32.totalorder %s17, 0
    %p85 = por %p83, %p84
    %p86 = scmp.ne.s32.totalorder %s74, %s75
    %p87 = scmp.eq.s32.totalorder %s18, 1
    %p88 = por %p86, %p87
    %p90 = scmp.ne.s32.totalorder %s75, %s89
    %p91 = scmp.eq.s32.totalorder %s18, 0
    %p92 = por %p90, %p91
    %s94 = sadd.s32 %s93, 1
    %p97 = scmp.eq.s32.totalorder %s12, 1
    %p98 = scmp.ne.s32.totalorder %s93, %s95
    %p99 = scmp.eq.s32.totalorder %s12, 0
    %p100 = por %p98, %p99
    %p101 = scmp.ne.s32.totalorder %s93, %s95
    %p102 = scmp.eq.s32.totalorder %s17, 1
    %p103 = por %p101, %p102
    %p104 = scmp.ne.s32.totalorder %s95, %s96
    %p105 = scmp.eq.s32.totalorder %s17, 0
    %p106 = por %p104, %p105
    %p107 = scmp.ne.s32.totalorder %s95, %s96
    %p108 = scmp.eq.s32.totalorder %s18, 1
    %p109 = por %p107, %p108
    %p111 = scmp.ne.s32.totalorder %s96, %s110
    %p112 = scmp.eq.s32.totalorder %s18, 0
    %p113 = por %p111, %p112
    %s115 = sadd.s32 %s114, 1
    %p118 = scmp.eq.s32.totalorder %s12, 1
    %p119 = scmp.ne.s32.totalorder %s114, %s116
    %p120 = scmp.eq.s32.totalorder %s12, 0
    %p121 = por %p119, %p120
    %p122 = scmp.ne.s32.totalorder %s114, %s116
    %p123 = scmp.eq.s32.totalorder %s17, 1
    %p124 = por %p122, %p123
    %p125 = scmp.ne.s32.totalorder %s116, %s117
    %p126 = scmp.eq.s32.totalorder %s17, 0
    %p127 = por %p125, %p126
    %p128 = scmp.ne.s32.totalorder %s116, %s117
    %p129 = scmp.eq.s32.totalorder %s18, 1
    %p130 = por %p128, %p129
    %p132 = scmp.ne.s32.totalorder %s117, %s131
    %p133 = scmp.eq.s32.totalorder %s18, 0
    %p134 = por %p132, %p133
    %s136 = sadd.s32 %s135, 1
    %p139 = scmp.eq.s32.totalorder %s12, 1
    %p140 = scmp.ne.s32.totalorder %s135, %s137
    %p141 = scmp.eq.s32.totalorder %s12, 0
    %p142 = por %p140, %p141
    %p143 = scmp.ne.s32.totalorder %s135, %s137
    %p144 = scmp.eq.s32.totalorder %s17, 1
    %p145 = por %p143, %p144
    %p146 = scmp.ne.s32.totalorder %s137, %s138
    %p147 = scmp.eq.s32.totalorder %s17, 0
    %p148 = por %p146, %p147
    %p149 = scmp.ne.s32.totalorder %s137, %s138
    %p150 = scmp.eq.s32.totalorder %s18, 1
    %p151 = por %p149, %p150
    %p153 = scmp.ne.s32.totalorder %s138, %s152
    %p154 = scmp.eq.s32.totalorder %s18, 0
    %p155 = por %p153, %p154
    %s156 = ssub.s32 %s12, %s19
    %p157 = scmp.eq.s32.totalorder %s156, 0
    %s159 = sadd.s32 %s158, 1
    %s160 = scalar_select %p157, %s158, %s159
    %p163 = pneg %p157
    %p164 = scmp.eq.s32.totalorder %s12, 1
    %p165 = por %p163, %p164
    %p166 = scmp.ne.s32.totalorder %s158, %s161
    %p167 = scmp.eq.s32.totalorder %s12, 0
    %p168 = por %p166, %p167
    %p169 = scmp.ne.s32.totalorder %s158, %s161
    %p170 = scmp.eq.s32.totalorder %s17, 1
    %p171 = por %p169, %p170
    %p172 = scmp.ne.s32.totalorder %s161, %s162
    %p173 = scmp.eq.s32.totalorder %s17, 0
    %p174 = por %p172, %p173
    %p175 = scmp.ne.s32.totalorder %s161, %s162
    %p176 = scmp.eq.s32.totalorder %s18, 1
    %p177 = por %p175, %p176
    %p179 = scmp.ne.s32.totalorder %s162, %s178
    %p180 = scmp.eq.s32.totalorder %s18, 0
    %p181 = por %p179, %p180
    %p182 = scmp.le.s32.totalorder 1, %s12
    %p183 = scmp.lt.s32.totalorder %s12, 3
    %p184 = pnand %p182, %p183
    %p185 = pneg %p184
    // Predicated region
    $region9: #{skc.1} parent=5 // pred_check
      _
    $region10: #{skc.1} parent=5 // pred_check_branch
      %187 = sbr.rel (%p184) target = $region12
    $region11: #{skc.1} parent=5 // pred_region
      %s188 = ssub.s32 %s12, 1
      // Predicated region
      $region13: #{skc.1} parent=11 // pred_check
        %p189 = pneg %p85
      $region14: #{skc.1} parent=11 // pred_check_branch
        %191 = sbr.rel (%p189) target = $region16
      $region15: #{skc.1} parent=11 // pred_region
        _
      $region16: #{skc.1} parent=11 // pred_fallthru
        _
      // Predicated region
      $region17: #{skc.1} parent=11 // pred_check
        %p192 = pneg %p106
      $region18: #{skc.1} parent=11 // pred_check_branch
        %194 = sbr.rel (%p192) target = $region20
      $region19: #{skc.1} parent=11 // pred_region
        _
      $region20: #{skc.1} parent=11 // pred_fallthru
        _
      // Predicated region
      $region21: #{skc.1} parent=11 // pred_check
        %p195 = pneg %p127
      $region22: #{skc.1} parent=11 // pred_check_branch
        %197 = sbr.rel (%p195) target = $region24
      $region23: #{skc.1} parent=11 // pred_region
        _
      $region24: #{skc.1} parent=11 // pred_fallthru
        _
      // Predicated region
      $region25: #{skc.1} parent=11 // pred_check
        %p198 = pneg %p148
      $region26: #{skc.1} parent=11 // pred_check_branch
        %200 = sbr.rel (%p198) target = $region28
      $region27: #{skc.1} parent=11 // pred_region
        _
      $region28: #{skc.1} parent=11 // pred_fallthru
        _
    $region12: #{skc.1} parent=5 // pred_fallthru
      _
    %p201 = scmp.lt.s32.totalorder %s12, 2
    // Predicated region
    $region29: #{skc.1} parent=5 // pred_check
      %p202 = pneg %p201
    $region30: #{skc.1} parent=5 // pred_check_branch
      %204 = sbr.rel (%p202) target = $region32
    $region31: #{skc.1} parent=5 // pred_region
      // Predicated region
      $region33: #{skc.1} parent=31 // pred_check
        %p205 = pneg %p32
      $region34: #{skc.1} parent=31 // pred_check_branch
        %207 = sbr.rel (%p205) target = $region36
      $region35: #{skc.1} parent=31 // pred_region
        %p208 = scmp.lt.s32.totalorder %s12, 1
        %s209 = scalar_select %p208, %s12, 1
        %s210 = smul.addr %s209, 2
        %s211 = smul.addr %s210, 8
        %s212 = scalar_lea.vmem %s0, %s211
      $region36: #{skc.1} parent=31 // pred_fallthru
        _
      // Predicated region
      $region37: #{skc.1} parent=31 // pred_check
        %p213 = pneg %p58
      $region38: #{skc.1} parent=31 // pred_check_branch
        %215 = sbr.rel (%p213) target = $region40
      $region39: #{skc.1} parent=31 // pred_region
        %p216 = scmp.lt.s32.totalorder %s12, 1
        %s217 = scalar_select %p216, %s12, 1
        %s218 = smul.addr %s217, 2
        %s219 = smul.addr %s218, 8
        %s220 = scalar_lea.vmem %s1, %s219
      $region40: #{skc.1} parent=31 // pred_fallthru
        _
    $region32: #{skc.1} parent=5 // pred_fallthru
      _
    %p221 = scmp.le.s32.totalorder 1, %s12
    %p222 = scmp.lt.s32.totalorder %s12, 3
    %p223 = pnand %p221, %p222
    %p224 = pneg %p223
    // Predicated region
    $region41: #{skc.1} parent=5 // pred_check
      _
    $region42: #{skc.1} parent=5 // pred_check_branch
      %226 = sbr.rel (%p223) target = $region44
    $region43: #{skc.1} parent=5 // pred_region
      %s227 = ssub.s32 %s12, 1
      %p228 = scmp.lt.s32.totalorder %s17, 1
      %s229 = scalar_select %p228, %s17, 1
      %s230 = smul.addr %s229, 2
      %s231 = smul.addr %s230, 8
      %s232 = scalar_lea.vmem %s0, %s231
      %p233 = pneg %p38
      %p234 = pneg %p35
      %p235 = scmp.lt.s32.totalorder %s17, 1
      %s236 = scalar_select %p235, %s17, 1
      %s237 = smul.addr %s236, 2
      %s238 = smul.addr %s237, 8
      %s239 = scalar_lea.vmem %s1, %s238
      %p240 = pneg %p64
      %p241 = pneg %p61
      %p242 = pneg %p85
      %p243 = pneg %p82
      %p244 = pneg %p106
      %p245 = pneg %p103
      %p246 = pneg %p127
      %p247 = pneg %p124
      %p248 = pneg %p148
      %p249 = pneg %p145
      %p250 = pneg %p174
      %p251 = pneg %p171
      %p252 = scmp.lt.s32.totalorder %s17, 1
      %s253 = scalar_select %p252, %s17, 1
      %s254 = smul.addr %s253, 4
      %s255 = smul.addr %s254, 8
      %s256 = scalar_lea.vmem %s6, %s255
      %p257 = scmp.lt.s32.totalorder %s17, 1
      %s258 = scalar_select %p257, %s17, 1
      %s259 = smul.addr %s258, 2
      %s260 = smul.addr %s259, 8
      %s261 = scalar_lea.vmem %s0, %s260
      %p262 = scmp.lt.s32.totalorder %s17, 1
      %s263 = scalar_select %p262, %s17, 1
      %s264 = smul.addr %s263, 2
      %s265 = smul.addr %s264, 8
      %s266 = scalar_lea.vmem %s1, %s265
      %p267 = scmp.lt.s32.totalorder %s17, 1
      %s268 = scalar_select %p267, %s17, 1
      %s269 = smul.addr %s268, 4
      %s270 = smul.addr %s269, 8
      %s271 = scalar_lea.vmem %s6, %s270
      %v272 = vld [vmem:[%s261] sm:$0xff]
      %v273 = vld [vmem:[%s261 + $0x8] sm:$0xff]
      %v274 = vld [vmem:[%s266] sm:$0xff]
      %v275 = vld [vmem:[%s266 + $0x8] sm:$0xff]
      %v276 = vld [vmem:[%s2] sm:$0xf]
      %v277 = vadd.f32 %v272, %v273
      %278 = vadd.xlane.f32.xlu0 %v277
      %v279 = vpop.xlane.xlu0 %278
      %vm280 = vcmask 130048
      %v281 = vsel %vm280, %v272, 0.0
      %282 = vadd.xlane.f32.xlu0 %v281
      %v283 = vpop.xlane.xlu0 %282
      %285 = vrot.lane.b32.xlu0 %v273, 16
      %v286 = vpop.permute.xlu0 %285
      %v288 = vsel %vm280, %v286, 0.0
      %289 = vadd.xlane.f32.xlu0 %v288
      %v290 = vpop.xlane.xlu0 %289
      %v292 = vlaneseq
      %v293 = vshrl.u32 %v292, 7
      %v294 = vsub.s32 0, %v293
      %v295 = vrot.slane %v276, %v294
      %v296 = vlaneseq
      %v297 = vshrl.u32 %v296, 7
      %v298 = vsub.s32 2, %v297
      %v299 = vrot.slane %v276, %v298
      %v302 = vlaneseq
      %v303 = vshrl.u32 %v302, 7
      %v304 = vsub.s32 0, %v303
      %v305 = vrot.slane %v295, %v304
      %v306 = vlaneseq
      %v307 = vshrl.u32 %v306, 7
      %v308 = vsub.s32 0, %v307
      %v309 = vrot.slane %v299, %v308
      %v310 = vmul.f32 %v272, %v305
      %v311 = vmul.f32 %v273, %v309
      %v312 = vadd.f32 %v310, %v311
      %313 = vadd.xlane.f32.xlu0 %v312
      %v314 = vpop.xlane.xlu0 %313
      %v315 = vlaneseq
      %v316 = vshrl.u32 %v315, 7
      %v317 = vsub.s32 1, %v316
      %v318 = vrot.slane %v276, %v317
      %v319 = vlaneseq
      %v320 = vshrl.u32 %v319, 7
      %v321 = vsub.s32 3, %v320
      %v322 = vrot.slane %v276, %v321
      %v325 = vlaneseq
      %v326 = vshrl.u32 %v325, 7
      %v327 = vsub.s32 1, %v326
      %v328 = vrot.slane %v318, %v327
      %v329 = vlaneseq
      %v330 = vshrl.u32 %v329, 7
      %v331 = vsub.s32 1, %v330
      %v332 = vrot.slane %v322, %v331
      %v333 = vmul.f32 %v272, %v328
      %v334 = vmul.f32 %v273, %v332
      %v335 = vadd.f32 %v333, %v334
      %336 = vadd.xlane.f32.xlu0 %v335
      %v337 = vpop.xlane.xlu0 %336
      %v338 = vadd.f32 %v272, 0.0
      %v339 = vadd.f32 %v273, 0.0
      %v340 = vadd.f32 %v274, %v275
      %341 = vadd.xlane.f32.xlu0 %v340
      %v342 = vpop.xlane.xlu0 %341
      %v343 = vsel %vm280, %v274, 0.0
      %344 = vadd.xlane.f32.xlu0 %v343
      %v345 = vpop.xlane.xlu0 %344
      %347 = vrot.lane.b32.xlu0 %v275, 16
      %v348 = vpop.permute.xlu0 %347
      %v350 = vsel %vm280, %v348, 0.0
      %351 = vadd.xlane.f32.xlu0 %v350
      %v352 = vpop.xlane.xlu0 %351
      %v353 = vmul.f32 %v274, %v305
      %v354 = vmul.f32 %v275, %v309
      %v355 = vadd.f32 %v353, %v354
      %356 = vadd.xlane.f32.xlu0 %v355
      %v357 = vpop.xlane.xlu0 %356
      %v358 = vmul.f32 %v274, %v328
      %v359 = vmul.f32 %v275, %v332
      %v360 = vadd.f32 %v358, %v359
      %361 = vadd.xlane.f32.xlu0 %v360
      %v362 = vpop.xlane.xlu0 %361
      %v363 = vadd.f32 %v274, 0.0
      %v364 = vadd.f32 %v275, 0.0
      %v366 = vlaneseq
      %v367 = vand.u32 %v366, 127
      %v368 = vlaneseq
      %v369 = vshrl.u32 %v368, 7
      %v370 = vsub.s32 %v367, %v369
      %v371 = vrot.slane %v279, %v370
      %v374 = vadd.s32 %v367, 4294967288
      %v375 = vlaneseq
      %v376 = vshrl.u32 %v375, 7
      %v377 = vsub.s32 %v374, %v376
      %v378 = vrot.slane %v283, %v377
      %v381 = vadd.s32 %v367, 4294967280
      %v382 = vlaneseq
      %v383 = vshrl.u32 %v382, 7
      %v384 = vsub.s32 %v381, %v383
      %v385 = vrot.slane %v290, %v384
      %v388 = vadd.s32 %v367, 4294967272
      %v389 = vlaneseq
      %v390 = vshrl.u32 %v389, 7
      %v391 = vsub.s32 %v388, %v390
      %v392 = vrot.slane %v314, %v391
      %v395 = vadd.s32 %v367, 4294967264
      %v396 = vlaneseq
      %v397 = vshrl.u32 %v396, 7
      %v398 = vsub.s32 %v395, %v397
      %v399 = vrot.slane %v337, %v398
      %402 = vset.pattern.permute.xlu0 0
      %403 = vperm.xlu0 %402, %v338
      %v404 = vpop.permute.xlu0 %403
      %v405 = vadd.s32 %v367, 4294967256
      %v406 = vlaneseq
      %v407 = vshrl.u32 %v406, 7
      %v408 = vsub.s32 %v405, %v407
      %v409 = vrot.slane %v404, %v408
      %411 = vset.pattern.permute.xlu0 15
      %412 = vperm.xlu0 %411, %v338
      %v413 = vpop.permute.xlu0 %412
      %v414 = vadd.s32 %v367, 4294967248
      %v415 = vlaneseq
      %v416 = vshrl.u32 %v415, 7
      %v417 = vsub.s32 %v414, %v416
      %v418 = vrot.slane %v413, %v417
      %421 = vset.pattern.permute.xlu0 112
      %422 = vperm.xlu0 %421, %v339
      %v423 = vpop.permute.xlu0 %422
      %v424 = vadd.s32 %v367, 4294967240
      %v425 = vlaneseq
      %v426 = vshrl.u32 %v425, 7
      %v427 = vsub.s32 %v424, %v426
      %v428 = vrot.slane %v423, %v427
      %430 = vset.pattern.permute.xlu0 127
      %431 = vperm.xlu0 %430, %v339
      %v432 = vpop.permute.xlu0 %431
      %v433 = vadd.s32 %v367, 4294967232
      %v434 = vlaneseq
      %v435 = vshrl.u32 %v434, 7
      %v436 = vsub.s32 %v433, %v435
      %v437 = vrot.slane %v432, %v436
      %v440 = vadd.s32 %v367, 4294967224
      %v441 = vlaneseq
      %v442 = vshrl.u32 %v441, 7
      %v443 = vsub.s32 %v440, %v442
      %v444 = vrot.slane %v342, %v443
      %v447 = vadd.s32 %v367, 4294967216
      %v448 = vlaneseq
      %v449 = vshrl.u32 %v448, 7
      %v450 = vsub.s32 %v447, %v449
      %v451 = vrot.slane %v345, %v450
      %v454 = vadd.s32 %v367, 4294967208
      %v455 = vlaneseq
      %v456 = vshrl.u32 %v455, 7
      %v457 = vsub.s32 %v454, %v456
      %v458 = vrot.slane %v352, %v457
      %v461 = vadd.s32 %v367, 4294967200
      %v462 = vlaneseq
      %v463 = vshrl.u32 %v462, 7
      %v464 = vsub.s32 %v461, %v463
      %v465 = vrot.slane %v357, %v464
      %v468 = vadd.s32 %v367, 4294967192
      %v469 = vlaneseq
      %v470 = vshrl.u32 %v469, 7
      %v471 = vsub.s32 %v468, %v470
      %v472 = vrot.slane %v362, %v471
      %475 = vset.pattern.permute.xlu0 0
      %476 = vperm.xlu0 %475, %v363
      %v477 = vpop.permute.xlu0 %476
      %v478 = vadd.s32 %v367, 4294967184
      %v479 = vlaneseq
      %v480 = vshrl.u32 %v479, 7
      %v481 = vsub.s32 %v478, %v480
      %v482 = vrot.slane %v477, %v481
      %484 = vset.pattern.permute.xlu0 15
      %485 = vperm.xlu0 %484, %v363
      %v486 = vpop.permute.xlu0 %485
      %v487 = vadd.s32 %v367, 4294967176
      %v488 = vlaneseq
      %v489 = vshrl.u32 %v488, 7
      %v490 = vsub.s32 %v487, %v489
      %v491 = vrot.slane %v486, %v490
      %vm493 = vcmask 64512
      %v494 = vsel %vm493, %v371, %v378
      %v495 = vsel %vm280, %v494, %v385
      %vm496 = vcmask 195584
      %v497 = vsel %vm496, %v495, %v392
      %vm498 = vcmask 261120
      %v499 = vsel %vm498, %v497, %v399
      %vm500 = vcmask 326656
      %v501 = vsel %vm500, %v499, %v409
      %vm502 = vcmask 392192
      %v503 = vsel %vm502, %v501, %v418
      %vm504 = vcmask 457728
      %v505 = vsel %vm504, %v503, %v428
      %vm506 = vcmask 523264
      %v507 = vsel %vm506, %v505, %v437
      %vm508 = vcmask 588800
      %v509 = vsel %vm508, %v507, %v444
      %vm510 = vcmask 654336
      %v511 = vsel %vm510, %v509, %v451
      %vm512 = vcmask 719872
      %v513 = vsel %vm512, %v511, %v458
      %vm514 = vcmask 785408
      %v515 = vsel %vm514, %v513, %v465
      %vm516 = vcmask 850944
      %v517 = vsel %vm516, %v515, %v472
      %vm518 = vcmask 916480
      %v519 = vsel %vm518, %v517, %v482
      %vm520 = vcmask 982016
      %v521 = vsel %vm520, %v519, %v491
      %523 = vset.pattern.permute.xlu0 112
      %524 = vperm.xlu0 %523, %v364
      %v525 = vpop.permute.xlu0 %524
      %v526 = vlaneseq
      %v527 = vshrl.u32 %v526, 7
      %v528 = vsub.s32 %v367, %v527
      %v529 = vrot.slane %v525, %v528
      %531 = vset.pattern.permute.xlu0 127
      %532 = vperm.xlu0 %531, %v364
      %v533 = vpop.permute.xlu0 %532
      %v534 = vlaneseq
      %v535 = vshrl.u32 %v534, 7
      %v536 = vsub.s32 %v374, %v535
      %v537 = vrot.slane %v533, %v536
      %v539 = vsel %vm493, %v529, %v537
      %v540 = vld [vmem:[%s5] sm:$0xff]
      %v541 = vld [vmem:[%s3] sm:$0xff]
      %v542 = vld [vmem:[%s3 + $0x8] sm:$0xff]
      %v543 = vld [vmem:[%s3 + $0x10] sm:$0xff]
      %v544 = vld [vmem:[%s3 + $0x18] sm:$0xff]
      %v545 = vld [vmem:[%s3 + $0x20] sm:$0xff]
      %v546 = vld [vmem:[%s3 + $0x28] sm:$0xff]
      %v547 = vld [vmem:[%s3 + $0x30] sm:$0xff]
      %v548 = vld [vmem:[%s3 + $0x38] sm:$0xff]
      %v549 = vld [vmem:[%s3 + $0x40] sm:$0xff]
      %v550 = vld [vmem:[%s3 + $0x48] sm:$0xff]
      %v551 = vld [vmem:[%s3 + $0x50] sm:$0xff]
      %v552 = vld [vmem:[%s3 + $0x58] sm:$0xff]
      %v553 = vld [vmem:[%s3 + $0x60] sm:$0xff]
      %v554 = vld [vmem:[%s3 + $0x68] sm:$0xff]
      %v555 = vld [vmem:[%s3 + $0x70] sm:$0xff]
      %v556 = vld [vmem:[%s3 + $0x78] sm:$0xff]
      %v557 = vld [vmem:[%s3 + $0x80] sm:$0xff]
      %v558 = vld [vmem:[%s3 + $0x88] sm:$0xff]
      %v560 = vsel %vm280, %v539, 0
      %562 = vmatprep.subr.mxu0 0.0
      %563 = vmatpush1.msra.mxu0 %v541
      %564 = vmatprep.subr.mxu0 0.0
      %565 = vmatpush1.msra.mxu0 %v542
      %566 = vmatprep.subr.mxu0 0.0
      %567 = vmatpush1.msra.mxu0 %v543
      %568 = vmatprep.subr.mxu0 0.0
      %569 = vmatpush1.msra.mxu0 %v544
      %570 = vmatprep.subr.mxu0 0.0
      %571 = vmatpush1.msra.mxu0 %v545
      %572 = vmatprep.subr.mxu0 0.0
      %573 = vmatpush1.msra.mxu0 %v546
      %574 = vmatprep.subr.mxu0 0.0
      %575 = vmatpush1.msra.mxu0 %v547
      %576 = vmatprep.subr.mxu0 0.0
      %577 = vmatpush1.msra.mxu0 %v548
      %578 = vmatprep.subr.mxu0 0.0
      %579 = vmatpush1.msra.mxu0 %v549
      %580 = vmatprep.subr.mxu0 0.0
      %581 = vmatpush1.msra.mxu0 %v550
      %582 = vmatprep.subr.mxu0 0.0
      %583 = vmatpush1.msra.mxu0 %v551
      %584 = vmatprep.subr.mxu0 0.0
      %585 = vmatpush1.msra.mxu0 %v552
      %586 = vmatprep.subr.mxu0 0.0
      %587 = vmatpush1.msra.mxu0 %v553
      %588 = vmatprep.subr.mxu0 0.0
      %589 = vmatpush1.msra.mxu0 %v554
      %590 = vmatprep.subr.mxu0 0.0
      %591 = vmatpush1.msra.mxu0 %v555
      %592 = vmatprep.subr.mxu0 0.0
      %593 = vmatpush1.msra.mxu0 %v556
      %594 = vmatprep.subr.mxu0 0.0
      %595 = vmatpush1.msra.mxu0 %v557
      %596 = vmatprep.subr.mxu0 0.0
      %597 = vmatpush1.msra.mxu0 %v558
      %598 = vmatprep.subr.mxu0 0.0
      %599 = vmatpush1.msra.mxu0 0.0
      %600 = vmatprep.subr.mxu0 0.0
      %601 = vmatpush1.msra.mxu0 0.0
      %602 = vmatprep.subr.mxu0 0.0
      %603 = vmatpush1.msra.mxu0 0.0
      %604 = vmatprep.subr.mxu0 0.0
      %605 = vmatpush1.msra.mxu0 0.0
      %606 = vmatprep.subr.mxu0 0.0
      %607 = vmatpush1.msra.mxu0 0.0
      %608 = vmatprep.subr.mxu0 0.0
      %609 = vmatpush1.msra.mxu0 0.0
      %610 = vmatprep.subr.mxu0 0.0
      %611 = vmatpush1.msra.mxu0 0.0
      %612 = vmatprep.subr.mxu0 0.0
      %613 = vmatpush1.msra.mxu0 0.0
      %614 = vmatprep.subr.mxu0 0.0
      %615 = vmatpush1.msra.mxu0 0.0
      %616 = vmatprep.subr.mxu0 0.0
      %617 = vmatpush1.msra.mxu0 0.0
      %618 = vmatprep.subr.mxu0 0.0
      %619 = vmatpush1.msra.mxu0 0.0
      %620 = vmatprep.subr.mxu0 0.0
      %621 = vmatpush1.msra.mxu0 0.0
      %622 = vmatprep.subr.mxu0 0.0
      %623 = vmatpush1.msra.mxu0 0.0
      %624 = vmatprep.subr.mxu0 0.0
      %625 = vmatpush1.msra.mxu0 0.0
      %626 = vmatprep.mubr.f32.mxu0 %v560
      %627 = vmatmul.mubr.f32.gmra.mrb[0].mxu0 %v521
      %v628 = vpop.f32.mrb[0].mxu0
      %v629 = vadd.f32 %v540, %v628
      %v630 = vpop.f32.mrb[0].mxu0
      %631 = vdwg.mxu0
      %v632 = vld [vmem:[%s4] sm:$0xff]
      %v633 = vld [vmem:[%s4 + $0x8] sm:$0xff]
      %v634 = vld [vmem:[%s4 + $0x10] sm:$0xff]
      %v635 = vld [vmem:[%s4 + $0x18] sm:$0xff]
      %v636 = vld [vmem:[%s4 + $0x20] sm:$0xff]
      %v637 = vld [vmem:[%s4 + $0x28] sm:$0xff]
      %v639 = vrot.slane %v540, 1
      %v642 = vsel %vm280, %v629, 0
      %644 = vmatprep.subr.mxu0 0.0
      %645 = vmatpush1.msra.mxu0 %v632
      %646 = vmatprep.subr.mxu0 0.0
      %647 = vmatpush1.msra.mxu0 %v633
      %648 = vmatprep.subr.mxu0 0.0
      %649 = vmatpush1.msra.mxu0 0.0
      %650 = vmatprep.subr.mxu0 0.0
      %651 = vmatpush1.msra.mxu0 0.0
      %652 = vmatprep.subr.mxu0 0.0
      %653 = vmatpush1.msra.mxu0 0.0
      %654 = vmatprep.subr.mxu0 0.0
      %655 = vmatpush1.msra.mxu0 0.0
      %656 = vmatprep.subr.mxu0 0.0
      %657 = vmatpush1.msra.mxu0 0.0
      %658 = vmatprep.subr.mxu0 0.0
      %659 = vmatpush1.msra.mxu0 0.0
      %660 = vmatprep.subr.mxu0 0.0
      %661 = vmatpush1.msra.mxu0 0.0
      %662 = vmatprep.subr.mxu0 0.0
      %663 = vmatpush1.msra.mxu0 0.0
      %664 = vmatprep.subr.mxu0 0.0
      %665 = vmatpush1.msra.mxu0 0.0
      %666 = vmatprep.subr.mxu0 0.0
      %667 = vmatpush1.msra.mxu0 0.0
      %668 = vmatprep.subr.mxu0 0.0
      %669 = vmatpush1.msra.mxu0 0.0
      %670 = vmatprep.subr.mxu0 0.0
      %671 = vmatpush1.msra.mxu0 0.0
      %672 = vmatprep.subr.mxu0 0.0
      %673 = vmatpush1.msra.mxu0 0.0
      %674 = vmatprep.subr.mxu0 0.0
      %675 = vmatpush1.msra.mxu0 0.0
      %676 = vmatprep.subr.mxu0 0.0
      %677 = vmatpush1.msra.mxu0 0.0
      %678 = vmatprep.subr.mxu0 0.0
      %679 = vmatpush1.msra.mxu0 0.0
      %680 = vmatprep.subr.mxu0 0.0
      %681 = vmatpush1.msra.mxu0 0.0
      %682 = vmatprep.subr.mxu0 0.0
      %683 = vmatpush1.msra.mxu0 0.0
      %684 = vmatprep.subr.mxu0 0.0
      %685 = vmatpush1.msra.mxu0 0.0
      %686 = vmatprep.subr.mxu0 0.0
      %687 = vmatpush1.msra.mxu0 0.0
      %688 = vmatprep.subr.mxu0 0.0
      %689 = vmatpush1.msra.mxu0 0.0
      %690 = vmatprep.subr.mxu0 0.0
      %691 = vmatpush1.msra.mxu0 0.0
      %692 = vmatprep.subr.mxu0 0.0
      %693 = vmatpush1.msra.mxu0 0.0
      %694 = vmatprep.subr.mxu0 0.0
      %695 = vmatpush1.msra.mxu0 0.0
      %696 = vmatprep.subr.mxu0 0.0
      %697 = vmatpush1.msra.mxu0 0.0
      %698 = vmatprep.subr.mxu0 0.0
      %699 = vmatpush1.msra.mxu0 0.0
      %700 = vmatprep.subr.mxu0 0.0
      %701 = vmatpush1.msra.mxu0 0.0
      %702 = vmatprep.subr.mxu0 0.0
      %703 = vmatpush1.msra.mxu0 0.0
      %704 = vmatprep.subr.mxu0 0.0
      %705 = vmatpush1.msra.mxu0 0.0
      %706 = vmatprep.subr.mxu0 0.0
      %707 = vmatpush1.msra.mxu0 0.0
      %708 = vmatprep.mubr.f32.mxu0 0.0
      %709 = vmatmul.mubr.f32.gmra.mrb[0].mxu0 %v642
      %v710 = vpop.f32.mrb[0].mxu0
      %v711 = vadd.f32 %v639, %v710
      %v712 = vpop.f32.mrb[0].mxu0
      %713 = vdwg.mxu0
      %v714 = vmax.f32 %v711, 0.0
      %v715 = vrot.slane %v540, 2
      %v718 = vsel %vm280, %v714, 0
      %720 = vmatprep.subr.mxu0 0.0
      %721 = vmatpush1.msra.mxu0 %v634
      %722 = vmatprep.subr.mxu0 0.0
      %723 = vmatpush1.msra.mxu0 %v635
      %724 = vmatprep.subr.mxu0 0.0
      %725 = vmatpush1.msra.mxu0 0.0
      %726 = vmatprep.subr.mxu0 0.0
      %727 = vmatpush1.msra.mxu0 0.0
      %728 = vmatprep.subr.mxu0 0.0
      %729 = vmatpush1.msra.mxu0 0.0
      %730 = vmatprep.subr.mxu0 0.0
      %731 = vmatpush1.msra.mxu0 0.0
      %732 = vmatprep.subr.mxu0 0.0
      %733 = vmatpush1.msra.mxu0 0.0
      %734 = vmatprep.subr.mxu0 0.0
      %735 = vmatpush1.msra.mxu0 0.0
      %736 = vmatprep.subr.mxu0 0.0
      %737 = vmatpush1.msra.mxu0 0.0
      %738 = vmatprep.subr.mxu0 0.0
      %739 = vmatpush1.msra.mxu0 0.0
      %740 = vmatprep.subr.mxu0 0.0
      %741 = vmatpush1.msra.mxu0 0.0
      %742 = vmatprep.subr.mxu0 0.0
      %743 = vmatpush1.msra.mxu0 0.0
      %744 = vmatprep.subr.mxu0 0.0
      %745 = vmatpush1.msra.mxu0 0.0
      %746 = vmatprep.subr.mxu0 0.0
      %747 = vmatpush1.msra.mxu0 0.0
      %748 = vmatprep.subr.mxu0 0.0
      %749 = vmatpush1.msra.mxu0 0.0
      %750 = vmatprep.subr.mxu0 0.0
      %751 = vmatpush1.msra.mxu0 0.0
      %752 = vmatprep.subr.mxu0 0.0
      %753 = vmatpush1.msra.mxu0 0.0
      %754 = vmatprep.subr.mxu0 0.0
      %755 = vmatpush1.msra.mxu0 0.0
      %756 = vmatprep.subr.mxu0 0.0
      %757 = vmatpush1.msra.mxu0 0.0
      %758 = vmatprep.subr.mxu0 0.0
      %759 = vmatpush1.msra.mxu0 0.0
      %760 = vmatprep.subr.mxu0 0.0
      %761 = vmatpush1.msra.mxu0 0.0
      %762 = vmatprep.subr.mxu0 0.0
      %763 = vmatpush1.msra.mxu0 0.0
      %764 = vmatprep.subr.mxu0 0.0
      %765 = vmatpush1.msra.mxu0 0.0
      %766 = vmatprep.subr.mxu0 0.0
      %767 = vmatpush1.msra.mxu0 0.0
      %768 = vmatprep.subr.mxu0 0.0
      %769 = vmatpush1.msra.mxu0 0.0
      %770 = vmatprep.subr.mxu0 0.0
      %771 = vmatpush1.msra.mxu0 0.0
      %772 = vmatprep.subr.mxu0 0.0
      %773 = vmatpush1.msra.mxu0 0.0
      %774 = vmatprep.subr.mxu0 0.0
      %775 = vmatpush1.msra.mxu0 0.0
      %776 = vmatprep.subr.mxu0 0.0
      %777 = vmatpush1.msra.mxu0 0.0
      %778 = vmatprep.subr.mxu0 0.0
      %779 = vmatpush1.msra.mxu0 0.0
      %780 = vmatprep.subr.mxu0 0.0
      %781 = vmatpush1.msra.mxu0 0.0
      %782 = vmatprep.subr.mxu0 0.0
      %783 = vmatpush1.msra.mxu0 0.0
      %784 = vmatprep.mubr.f32.mxu0 0.0
      %785 = vmatmul.mubr.f32.gmra.mrb[0].mxu0 %v718
      %v786 = vpop.f32.mrb[0].mxu0
      %v787 = vadd.f32 %v715, %v786
      %v788 = vpop.f32.mrb[0].mxu0
      %789 = vdwg.mxu0
      %v790 = vrot.slane %v540, 3
      %v793 = vsel %vm280, %v787, 0
      %795 = vmatprep.subr.mxu0 0.0
      %796 = vmatpush1.msra.mxu0 %v636
      %797 = vmatprep.subr.mxu0 0.0
      %798 = vmatpush1.msra.mxu0 %v637
      %799 = vmatprep.subr.mxu0 0.0
      %800 = vmatpush1.msra.mxu0 0.0
      %801 = vmatprep.subr.mxu0 0.0
      %802 = vmatpush1.msra.mxu0 0.0
      %803 = vmatprep.subr.mxu0 0.0
      %804 = vmatpush1.msra.mxu0 0.0
      %805 = vmatprep.subr.mxu0 0.0
      %806 = vmatpush1.msra.mxu0 0.0
      %807 = vmatprep.subr.mxu0 0.0
      %808 = vmatpush1.msra.mxu0 0.0
      %809 = vmatprep.subr.mxu0 0.0
      %810 = vmatpush1.msra.mxu0 0.0
      %811 = vmatprep.subr.mxu0 0.0
      %812 = vmatpush1.msra.mxu0 0.0
      %813 = vmatprep.subr.mxu0 0.0
      %814 = vmatpush1.msra.mxu0 0.0
      %815 = vmatprep.subr.mxu0 0.0
      %816 = vmatpush1.msra.mxu0 0.0
      %817 = vmatprep.subr.mxu0 0.0
      %818 = vmatpush1.msra.mxu0 0.0
      %819 = vmatprep.subr.mxu0 0.0
      %820 = vmatpush1.msra.mxu0 0.0
      %821 = vmatprep.subr.mxu0 0.0
      %822 = vmatpush1.msra.mxu0 0.0
      %823 = vmatprep.subr.mxu0 0.0
      %824 = vmatpush1.msra.mxu0 0.0
      %825 = vmatprep.subr.mxu0 0.0
      %826 = vmatpush1.msra.mxu0 0.0
      %827 = vmatprep.subr.mxu0 0.0
      %828 = vmatpush1.msra.mxu0 0.0
      %829 = vmatprep.subr.mxu0 0.0
      %830 = vmatpush1.msra.mxu0 0.0
      %831 = vmatprep.subr.mxu0 0.0
      %832 = vmatpush1.msra.mxu0 0.0
      %833 = vmatprep.subr.mxu0 0.0
      %834 = vmatpush1.msra.mxu0 0.0
      %835 = vmatprep.subr.mxu0 0.0
      %836 = vmatpush1.msra.mxu0 0.0
      %837 = vmatprep.subr.mxu0 0.0
      %838 = vmatpush1.msra.mxu0 0.0
      %839 = vmatprep.subr.mxu0 0.0
      %840 = vmatpush1.msra.mxu0 0.0
      %841 = vmatprep.subr.mxu0 0.0
      %842 = vmatpush1.msra.mxu0 0.0
      %843 = vmatprep.subr.mxu0 0.0
      %844 = vmatpush1.msra.mxu0 0.0
      %845 = vmatprep.subr.mxu0 0.0
      %846 = vmatpush1.msra.mxu0 0.0
      %847 = vmatprep.subr.mxu0 0.0
      %848 = vmatpush1.msra.mxu0 0.0
      %849 = vmatprep.subr.mxu0 0.0
      %850 = vmatpush1.msra.mxu0 0.0
      %851 = vmatprep.subr.mxu0 0.0
      %852 = vmatpush1.msra.mxu0 0.0
      %853 = vmatprep.subr.mxu0 0.0
      %854 = vmatpush1.msra.mxu0 0.0
      %855 = vmatprep.subr.mxu0 0.0
      %856 = vmatpush1.msra.mxu0 0.0
      %857 = vmatprep.subr.mxu0 0.0
      %858 = vmatpush1.msra.mxu0 0.0
      %859 = vmatprep.mubr.f32.mxu0 0.0
      %860 = vmatmul.mubr.f32.gmra.mrb[0].mxu0 %v793
      %v861 = vpop.f32.mrb[0].mxu0
      %v862 = vadd.f32 %v790, %v861
      %v863 = vpop.f32.mrb[0].mxu0
      %864 = vdwg.mxu0
      %vm865 = vcmask 122880
      %v866 = vsel %vm865, %v862, -inf
      %867 = vmax.xlane.f32.xlu0 %v866
      %v868 = vpop.xlane.xlu0 %867
      %v869 = vsub.f32 %v862, %v868
      %v870 = vmul.f32 %v869, 1.442695
      %v871 = vpow.pop %v870
      %v872 = vsel %vm865, %v871, 0.0
      %873 = vadd.xlane.f32.xlu0 %v872
      %v874 = vpop.xlane.xlu0 %873
      %v875 = vrcp.pop %v874
      %v876 = vmul.f32 %v871, %v875
      %v877 = vlaneseq
      %v878 = vshrl.u32 %v877, 7
      %v879 = vsub.s32 0, %v878
      %v880 = vrot.slane %v876, %v879
      %882 = vbcast.lane.b32.xlu0 %v880, 256
      %v883 = vpop.permute.xlu0 %882
      %s885 = sor.u32 256, 8
      %886 = vbcast.lane.b32.xlu0 %v880, %s885
      %v887 = vpop.permute.xlu0 %886
      %v888 = vmul.f32 %v272, %v883
      %v889 = vmul.f32 %v273, %v883
      %890 = vst [vmem:[%s271] sm:$0xff] %v888
      %891 = vst [vmem:[%s271 + $0x8] sm:$0xff] %v889
      %v892 = vmul.f32 %v274, %v887
      %v893 = vmul.f32 %v275, %v887
      %894 = vst [vmem:[%s271 + $0x10] sm:$0xff] %v892
      %895 = vst [vmem:[%s271 + $0x18] sm:$0xff] %v893
      %p896 = scmp.lt.s32.totalorder %s17, 1
      %s897 = scalar_select %p896, %s17, 1
      %s898 = smul.addr %s897, 4
      %s899 = smul.addr %s898, 8
      %s900 = scalar_lea.vmem %s6, %s899
      // Predicated region
      $region45: #{skc.1} parent=43 // pred_check
        %p901 = pneg %p171
      $region46: #{skc.1} parent=43 // pred_check_branch
        %903 = sbr.rel (%p901) target = $region48
      $region47: #{skc.1} parent=43 // pred_region
        _
      $region48: #{skc.1} parent=43 // pred_fallthru
        _
    $region44: #{skc.1} parent=5 // pred_fallthru
      _
    %p904 = scmp.le.s32.totalorder 2, %s12
    // Predicated region
    $region49: #{skc.1} parent=5 // pred_check
      %p905 = pneg %p904
    $region50: #{skc.1} parent=5 // pred_check_branch
      %907 = sbr.rel (%p905) target = $region52
    $region51: #{skc.1} parent=5 // pred_region
      %s908 = ssub.s32 %s12, 2
      // Predicated region
      $region53: #{skc.1} parent=51 // pred_check
        %p909 = pneg %p177
      $region54: #{skc.1} parent=51 // pred_check_branch
        %911 = sbr.rel (%p909) target = $region56
      $region55: #{skc.1} parent=51 // pred_region
        %p912 = scmp.lt.s32.totalorder %s18, 1
        %s913 = scalar_select %p912, %s18, 1
        %s914 = smul.addr %s913, 4
        %s915 = smul.addr %s914, 8
        %s916 = scalar_lea.vmem %s6, %s915
      $region56: #{skc.1} parent=51 // pred_fallthru
        _
    $region52: #{skc.1} parent=5 // pred_fallthru
      _
  $region6: #{skc.1} parent=0 // loop_footer
    %s16 = sadd.s32 1, %s12
  $region7: #{skc.1} parent=0 // loop_footer_branch
    %11 = sbr.rel target = $region3
  $region8: #{skc.1} parent=0 // loop_exit
    _

</llo_original>
